<compile_context>
chip_gen: v5e
topology: v5e:2x2
jax: 0.10.0
libtpu: 0.0.40
codegen_flags: <defaults>
</compile_context>

<pallas_src>
import functools

import jax
import jax.numpy as jnp
from jax import lax
from jax.experimental import pallas as pl
from jax.experimental.pallas import tpu as pltpu


def _multi_order_kernel(g_ref, out_ref, *, order: int, matmul_dtype):
    # g_ref:   (GB, N, N) block of adjacency matrices.
    # out_ref: (order, GB, N, N) block of masked powers.
    g = g_ref[...].astype(jnp.float32)          # accumulate in f32
    n = g.shape[-1]

    # Off-diagonal mask folded into a single select (one VPU op per order)
    # instead of building a float eye and multiplying.
    row = lax.broadcasted_iota(jnp.int32, (n, n), 0)
    col = lax.broadcasted_iota(jnp.int32, (n, n), 1)
    offdiag = row != col                        # (N, N) bool, broadcasts over GB

    # k = 1 term: the graph itself with the diagonal zeroed.
    p = g                                        # running power, f32
    out_ref[0] = jnp.where(offdiag, p, 0.0).astype(out_ref.dtype)

    # Higher orders: batched MXU matmuls (bf16 or f32 operands, f32 accum).
    g_mm = g.astype(matmul_dtype)
    for k in range(1, order):
        p = jnp.einsum(
            "bij,bjk->bik",
            p.astype(matmul_dtype),
            g_mm,
            preferred_element_type=jnp.float32,
        )
        out_ref[k] = jnp.where(offdiag, p, 0.0).astype(out_ref.dtype)


def multi_order(
    adj: jax.Array,
    order: int = 2,
    *,
    matmul_dtype=jnp.float32,
    block_graphs: int | None = None,
    target_block_bytes: int = 8 * 1024 * 1024,
):
    """adj: [G, N, N]. Returns stacked array out with out[k, g] = A_g^(k+1) * (1-eye).

    (Equivalent to the PyTorch module's result[g][k]; a stacked array is
    returned instead of a list-of-lists to avoid G*order device slices.)
    """
    G, N, N2 = adj.shape
    assert N == N2, "adjacency matrices must be square"
    assert order >= 1

    itemsize = jnp.dtype(adj.dtype).itemsize
    bytes_per_graph = (1 + order) * N * N * itemsize  # 1 input + order outputs

    if block_graphs is None:
        gb = max(1, target_block_bytes // bytes_per_graph)
        # Keep at least 2 grid steps (when G >= 2) so both v7x TensorCores
        # get work under dimension_semantics=("parallel",).
        gb = min(gb, max(1, -(-G // 2)))
    else:
        gb = block_graphs
    gb = max(1, min(gb, G))

    # Pad G up to a multiple of gb (zero graphs -> zero masked powers; sliced off).
    g_pad = -(-G // gb) * gb
    if g_pad != G:
        adj_p = jnp.concatenate(
            [adj, jnp.zeros((g_pad - G, N, N), adj.dtype)], axis=0
        )
    else:
        adj_p = adj

    grid = (g_pad // gb,)
    kernel = functools.partial(
        _multi_order_kernel, order=order, matmul_dtype=matmul_dtype
    )

    flops = 2 * g_pad * max(order - 1, 0) * N * N * N
    bytes_accessed = (1 + order) * g_pad * N * N * itemsize

    out = pl.pallas_call(
        kernel,
        out_shape=jax.ShapeDtypeStruct((order, g_pad, N, N), adj.dtype),
        grid_spec=pltpu.PrefetchScalarGridSpec(
            num_scalar_prefetch=0,
            grid=grid,
            in_specs=[pl.BlockSpec((gb, N, N), lambda i: (i, 0, 0))],
            out_specs=pl.BlockSpec((order, gb, N, N), lambda i: (0, i, 0, 0)),
        ),
        compiler_params=pltpu.CompilerParams(
            dimension_semantics=("parallel",),
            vmem_limit_bytes=48 * 1024 * 1024,  # within v7x's 64 MiB physical VMEM
        ),
        cost_estimate=pl.CostEstimate(
            flops=flops, transcendentals=0, bytes_accessed=bytes_accessed
        ),
    )(adj_p)

    if g_pad != G:
        out = out[:, :G]
    return out


def multi_order_nested(adj: jax.Array, order: int = 2, **kwargs):
    """API-parity helper mirroring the PyTorch return structure
    (list over graphs of list over orders). Avoid on hot paths: it issues
    G*order device slices; prefer the stacked array from multi_order()."""
    stacked = multi_order(adj, order=order, **kwargs)
    G = adj.shape[0]
    return [[stacked[k, g] for k in range(order)] for g in range(G)]


def _reference_multi_order_stacked(adj, order=2):
    """Plain-JAX reference; ref[k, g] == PyTorch result[g][k]."""
    mask = 1.0 - jnp.eye(adj.shape[1], dtype=adj.dtype)
    outs = []
    p = adj
    outs.append(p * mask)
    for _ in range(2, order + 1):
        p = jnp.einsum("bij,bjk->bik", p, adj)
        outs.append(p * mask)
    return jnp.stack(outs, axis=0)


if __name__ == "__main__":
    ORDER = 2
    G, N = 7, 16  # small demo; 7 graphs exercises the pad-to-block path

    key = jax.random.PRNGKey(0)
    adj = jax.random.uniform(key, (G, N, N), dtype=jnp.float32)

    # Default f32 matmul path (bit-faithful to the PyTorch f32 semantics).
    out = jax.block_until_ready(multi_order(adj, order=ORDER))
    ref = _reference_multi_order_stacked(adj, order=ORDER)
    assert out.shape == (ORDER, G, N, N)
    assert jnp.allclose(out, ref, atol=1e-4, rtol=1e-4), "f32 path mismatch"

    # bf16-operand / f32-accumulation MXU path (looser tolerance).
    out_bf16 = jax.block_until_ready(
        multi_order(adj, order=ORDER, matmul_dtype=jnp.bfloat16)
    )
    assert jnp.allclose(out_bf16, ref, atol=1e-1, rtol=1e-1), "bf16 path mismatch"

    print("KERNEL_OK")
</pallas_src>

<mosaic_0001>
module attributes {stable_mosaic.version = 11 : i64} {
  func.func @_multi_order_kernel(%arg0: i32, %arg1: memref<4x16x16xf32, #tpu.memory_space<vmem>>, %arg2: memref<2x4x16x16xf32, #tpu.memory_space<vmem>>) attributes {dimension_semantics = [#tpu.dimension_semantics<parallel>], iteration_bounds = array<i64: 2>, scalar_prefetch = 0 : i64, scratch_operands = 0 : i64, tpu.core_type = #tpu.core_type<tc>, window_params = [{transform_indices = @transform_0, window_bounds = array<i64: 4, 16, 16>}, {transform_indices = @transform_1, window_bounds = array<i64: 2, 4, 16, 16>}]} {
    %c0 = arith.constant 0 : index
    %c0_0 = arith.constant 0 : index
    %c0_1 = arith.constant 0 : index
    %0 = vector.load %arg1[%c0, %c0_0, %c0_1] : memref<4x16x16xf32, #tpu.memory_space<vmem>>, vector<4x16x16xf32>
    %1 = tpu.iota {dimensions = array<i32: 0>} : vector<16x16xi32>
    %2 = tpu.iota {dimensions = array<i32: 1>} : vector<16x16xi32>
    %3 = arith.cmpi ne, %1, %2 : vector<16x16xi32>
    %cst = arith.constant 0.000000e+00 : f32
    %4 = vector.shape_cast %3 : vector<16x16xi1> to vector<1x16x16xi1>
    %5 = vector.broadcast %4 : vector<1x16x16xi1> to vector<4x16x16xi1>
    %6 = vector.broadcast %cst : f32 to vector<4x16x16xf32>
    %7 = arith.select %5, %0, %6 : vector<4x16x16xi1>, vector<4x16x16xf32>
    %c0_2 = arith.constant 0 : index
    %c0_3 = arith.constant 0 : index
    %c0_4 = arith.constant 0 : index
    %c0_5 = arith.constant 0 : index
    %8 = vector.load %arg2[%c0_2, %c0_3, %c0_4, %c0_5] : memref<2x4x16x16xf32, #tpu.memory_space<vmem>>, vector<1x4x16x16xf32>
    %9 = vector.shape_cast %8 : vector<1x4x16x16xf32> to vector<4x16x16xf32>
    %10 = vector.shape_cast %7 : vector<4x16x16xf32> to vector<1x4x16x16xf32>
    tpu.vector_store %arg2[%c0_2, %c0_3, %c0_4, %c0_5], %10 {strides = array<i32>} : memref<2x4x16x16xf32, #tpu.memory_space<vmem>>, vector<1x4x16x16xf32>,
    "tpu.trace_start"() <{level = 10 : i32, message = "bij,bjk->bik"}> : () -> ()
    %cst_6 = arith.constant dense<0.000000e+00> : vector<4x16x16xf32>
    %11 = tpu.matmul %0, %0, %cst_6 {dimension_numbers = #tpu.dot_dimension_numbers<[2], [1], [1], [2], [0, 0, 0, 1, 1, 2], [0], [0]>} : vector<4x16x16xf32>, vector<4x16x16xf32>, vector<4x16x16xf32> -> vector<4x16x16xf32>
    %cst_7 = arith.constant 0.000000e+00 : f32
    "tpu.trace_stop"() : () -> ()
    %12 = vector.shape_cast %3 : vector<16x16xi1> to vector<1x16x16xi1>
    %13 = vector.broadcast %12 : vector<1x16x16xi1> to vector<4x16x16xi1>
    %14 = vector.broadcast %cst_7 : f32 to vector<4x16x16xf32>
    %15 = arith.select %13, %11, %14 : vector<4x16x16xi1>, vector<4x16x16xf32>
    %c1 = arith.constant 1 : index
    %c0_8 = arith.constant 0 : index
    %c0_9 = arith.constant 0 : index
    %c0_10 = arith.constant 0 : index
    %16 = vector.load %arg2[%c1, %c0_8, %c0_9, %c0_10] : memref<2x4x16x16xf32, #tpu.memory_space<vmem>>, vector<1x4x16x16xf32>
    %17 = vector.shape_cast %16 : vector<1x4x16x16xf32> to vector<4x16x16xf32>
    %18 = vector.shape_cast %15 : vector<4x16x16xf32> to vector<1x4x16x16xf32>
    tpu.vector_store %arg2[%c1, %c0_8, %c0_9, %c0_10], %18 {strides = array<i32>} : memref<2x4x16x16xf32, #tpu.memory_space<vmem>>, vector<1x4x16x16xf32>,
    return
  }
  func.func @transform_0(%arg0: i32) -> (i32, i32, i32) {
    %c0_i32 = arith.constant 0 : i32
    %c0_i32_0 = arith.constant 0 : i32
    %c0_i32_1 = arith.constant 0 : i32
    return %arg0, %c0_i32, %c0_i32_0 : i32, i32, i32
  }
  func.func @transform_1(%arg0: i32) -> (i32, i32, i32, i32) {
    %c0_i32 = arith.constant 0 : i32
    %c0_i32_0 = arith.constant 0 : i32
    %c0_i32_1 = arith.constant 0 : i32
    %c0_i32_2 = arith.constant 0 : i32
    return %c0_i32, %arg0, %c0_i32_0, %c0_i32_1 : i32, i32, i32, i32
  }
}

</mosaic_0001>

<llo_original>
// kernel: tpu_custom_call.1
$region0: #{tpu_custom_call.1}
  #allocation0 [shape = 'u32[]', space=smem, size = 0x4, offset = 0x4, fixed_abs, tag = 'smem constant byte address 0x4 - core index']
  #allocation1 [shape = 'u32[72,128]{1,0:T(1,128)}', space=vmem, size = 0x9000, scoped, tag = 'internal scratch']
  #allocation6 [shape = 's32[]', space=sflag, size = 0x4, offset = 0, fixed_abs, tag = 'sflag constant byte address 0x0 - dummy sync flag']
  %s0 = inlined_call_operand.hbm [shape: f32[8,16,16], index: 0, kind: input, shape index: {}]
  %s1 = inlined_call_operand.hbm [shape: f32[2,8,16,16], index: 1, kind: output, shape index: {}]
  %s2 = sld [smem:[#allocation0]]
  $region41: #{tpu_custom_call.1} parent=0
    _
  %s4 = ssub.s32 1, %s2
  %s5 = scalar_select 0, %s4, %s2
  $region1: #{tpu_custom_call.1} parent=0
    #allocation2 [shape = 'u8[65536]{0}', space=vmem, size = 0x10000, scoped, tag = 'input window, operand 0']
    #allocation3 [shape = 's32[2]{0}', space=sflag, size = 0x8, scoped, tag = 'scoped memory for tpu_custom_call.1']
    #allocation4 [shape = 's32[2]{0}', space=sflag, size = 0x8, scoped, tag = 'scoped memory for tpu_custom_call.1']
    #allocation5 [shape = 'u8[131072]{0}', space=vmem, size = 0x20000, scoped, tag = 'output window, operand 0']
    %6 = vsyncpa [#allocation3], 0
    %s7 = scalar_lea.sflag [#allocation3], 1
    %8 = vsyncpa %s7, 0
    %9 = vsyncpa [#allocation4], 0
    %s10 = scalar_lea.sflag [#allocation4], 1
    %11 = vsyncpa %s10, 0
    loop: start=0, step=1, limit=4
    $region2: #{tpu_custom_call.1} parent=1 // loop_pre_header
      _
    $region3: #{tpu_custom_call.1} parent=1 // loop_header
      %s13 = sphi 0, %s17
      %p14 = scmp.ge.s32.totalorder %s13, 4
      %s23 = sphi 0, %s25
      %s26 = sphi 0, %s23
      %s27 = sphi 0, %s26
      %s43 = sphi 0, %s27
      %s49 = sphi 0, %s51
      %s52 = sphi 0, %s49
      %s53 = sphi 0, %s52
      %s69 = sphi 0, %s53
    $region4: #{tpu_custom_call.1} parent=1 // loop_header_branch
      %16 = sbr.rel (%p14) target = $region8
    $region5: #{tpu_custom_call.1} parent=1 // loop_body
      %s18 = ssub.s32 %s13, 1
      %s19 = ssub.s32 %s13, 2
      %s20 = sadd.s32 %s13, 1
      %s21 = ssub.s32 %s13, %s20
      %p22 = scmp.eq.s32.totalorder %s21, 0
      %s24 = sadd.s32 %s23, 1
      %s25 = scalar_select %p22, %s23, %s24
      %p28 = pneg %p22
      %p29 = scmp.eq.s32.totalorder %s13, 1
      %p30 = por %p28, %p29
      %p31 = scmp.ne.s32.totalorder %s23, %s26
      %p32 = scmp.eq.s32.totalorder %s13, 0
      %p33 = por %p31, %p32
      %p34 = scmp.ne.s32.totalorder %s23, %s26
      %p35 = scmp.eq.s32.totalorder %s18, 1
      %p36 = por %p34, %p35
      %p37 = scmp.ne.s32.totalorder %s26, %s27
      %p38 = scmp.eq.s32.totalorder %s18, 0
      %p39 = por %p37, %p38
      %p40 = scmp.ne.s32.totalorder %s26, %s27
      %p41 = scmp.eq.s32.totalorder %s19, 1
      %p42 = por %p40, %p41
      %p44 = scmp.ne.s32.totalorder %s27, %s43
      %p45 = scmp.eq.s32.totalorder %s19, 0
      %p46 = por %p44, %p45
      %s47 = ssub.s32 %s13, %s20
      %p48 = scmp.eq.s32.totalorder %s47, 0
      %s50 = sadd.s32 %s49, 1
      %s51 = scalar_select %p48, %s49, %s50
      %p54 = pneg %p48
      %p55 = scmp.eq.s32.totalorder %s13, 1
      %p56 = por %p54, %p55
      %p57 = scmp.ne.s32.totalorder %s49, %s52
      %p58 = scmp.eq.s32.totalorder %s13, 0
      %p59 = por %p57, %p58
      %p60 = scmp.ne.s32.totalorder %s49, %s52
      %p61 = scmp.eq.s32.totalorder %s18, 1
      %p62 = por %p60, %p61
      %p63 = scmp.ne.s32.totalorder %s52, %s53
      %p64 = scmp.eq.s32.totalorder %s18, 0
      %p65 = por %p63, %p64
      %p66 = scmp.ne.s32.totalorder %s52, %s53
      %p67 = scmp.eq.s32.totalorder %s19, 1
      %p68 = por %p66, %p67
      %p70 = scmp.ne.s32.totalorder %s53, %s69
      %p71 = scmp.eq.s32.totalorder %s19, 0
      %p72 = por %p70, %p71
      %p73 = scmp.le.s32.totalorder 1, %s13
      %p74 = scmp.lt.s32.totalorder %s13, 3
      %p75 = pnand %p73, %p74
      %p76 = pneg %p75
      // Predicated region
      $region9: #{tpu_custom_call.1} parent=5 // pred_check
        _
      $region10: #{tpu_custom_call.1} parent=5 // pred_check_branch
        %78 = sbr.rel (%p75) target = $region12
      $region11: #{tpu_custom_call.1} parent=5 // pred_region
        %s79 = ssub.s32 %s13, 1
      $region12: #{tpu_custom_call.1} parent=5 // pred_fallthru
        _
      %p80 = scmp.lt.s32.totalorder %s13, 2
      // Predicated region
      $region13: #{tpu_custom_call.1} parent=5 // pred_check
        %p81 = pneg %p80
      $region14: #{tpu_custom_call.1} parent=5 // pred_check_branch
        %83 = sbr.rel (%p81) target = $region16
      $region15: #{tpu_custom_call.1} parent=5 // pred_region
        // Predicated region
        $region17: #{tpu_custom_call.1} parent=15 // pred_check
          %p84 = pneg %p33
        $region18: #{tpu_custom_call.1} parent=15 // pred_check_branch
          %86 = sbr.rel (%p84) target = $region20
        $region19: #{tpu_custom_call.1} parent=15 // pred_region
          %s87 = sand.u32 %s23, 1
          %s88 = scalar_lea.sflag [#allocation3], %s87
          %s89 = sand.u32 %s23, 1
          %s90 = smul.addr %s89, 64
          %s91 = scalar_lea.vmem [#allocation2], %s90
          %s92 = smul.u32 4, %s13
          %94 = vsyncadd %s88, 0
          %s95 = smul.addr %s92, 2
          %s96 = smul.addr %s95, 8
          %s97 = scalar_lea.hbm %s0, %s96
          %s98 = sshll.u32 %s97, 4
          %s99 = int_to_ptr.hbm [resolvable:$true] %s98
          %s100 = sshll.u32 %s91, 4
          %s101 = int_to_ptr.vmem [resolvable:$true] %s100
          %106 = dma.hbm_to_vmem [thread:$0]  %s99, 1024, %s101, %s88, 128, 128, 8
        $region20: #{tpu_custom_call.1} parent=15 // pred_fallthru
          _
      $region16: #{tpu_custom_call.1} parent=5 // pred_fallthru
        _
      %p107 = scmp.le.s32.totalorder 1, %s13
      %p108 = scmp.lt.s32.totalorder %s13, 3
      %p109 = pnand %p107, %p108
      %p110 = pneg %p109
      // Predicated region
      $region21: #{tpu_custom_call.1} parent=5 // pred_check
        _
      $region22: #{tpu_custom_call.1} parent=5 // pred_check_branch
        %112 = sbr.rel (%p109) target = $region24
      $region23: #{tpu_custom_call.1} parent=5 // pred_region
        %s113 = ssub.s32 %s13, 1
        %s114 = sand.u32 %s26, 1
        %s115 = scalar_lea.sflag [#allocation3], %s114
        %s116 = sand.u32 %s26, 1
        %s117 = smul.addr %s116, 64
        %s118 = scalar_lea.vmem [#allocation2], %s117
        // Predicated region
        $region25: #{tpu_custom_call.1} parent=23 // pred_check
          %p119 = pneg %p39
        $region26: #{tpu_custom_call.1} parent=23 // pred_check_branch
          %121 = sbr.rel (%p119) target = $region28
        $region27: #{tpu_custom_call.1} parent=23 // pred_region
          %123 = dma.done %s115, 1024
        $region28: #{tpu_custom_call.1} parent=23 // pred_fallthru
          _
        %s124 = sand.u32 %s26, 1
        %s125 = scalar_lea.sflag [#allocation3], %s124
        %s126 = sand.u32 %s26, 1
        %s127 = smul.addr %s126, 64
        %s128 = scalar_lea.vmem [#allocation2], %s127
        %p129 = pneg %p39
        %p130 = pneg %p36
        %p131 = pneg %p65
        %p132 = pneg %p62
        %s133 = sand.u32 %s52, 1
        %s134 = scalar_lea.sflag [#allocation4], %s133
        %s135 = sand.u32 %s52, 1
        %s136 = smul.addr %s135, 128
        %s137 = scalar_lea.vmem [#allocation5], %s136
        %s138 = smul.u32 4, %s18
        %s139 = smul.u32 4, %s18
        %v140 = vld [vmem:[%s118] sm:$0xff]
        %v141 = vld [vmem:[%s118 + $0x8] sm:$0xff]
        %v142 = vld [vmem:[%s118 + $0x10] sm:$0xff]
        %v143 = vld [vmem:[%s118 + $0x18] sm:$0xff]
        %v144 = vld [vmem:[%s118 + $0x20] sm:$0xff]
        %v145 = vld [vmem:[%s118 + $0x28] sm:$0xff]
        %v146 = vld [vmem:[%s118 + $0x30] sm:$0xff]
        %v147 = vld [vmem:[%s118 + $0x38] sm:$0xff]
        %v148 = vlaneseq
        %v149 = vshrl.u32 %v148, 7
        %v150 = vadd.s32 %v149, 8
        %v151 = vlaneseq
        %v152 = vand.u32 %v151, 127
        %vm153 = vcmp.ne.s32.totalorder %v149, %v152
        %vm154 = vcmp.ne.s32.totalorder %v150, %v152
        %v155 = vsel %vm153, 1, 0
        %v156 = vsel %vm154, 1, 0
        %vm157 = vcmp.eq.s32.totalorder %v155, 1
        %vm158 = vcmp.eq.s32.totalorder %v156, 1
        %v159 = vsel %vm157, %v140, 0.0
        %v160 = vsel %vm158, %v141, 0.0
        %v161 = vsel %vm157, %v142, 0.0
        %v162 = vsel %vm158, %v143, 0.0
        %v163 = vsel %vm157, %v144, 0.0
        %v164 = vsel %vm158, %v145, 0.0
        %v165 = vsel %vm157, %v146, 0.0
        %v166 = vsel %vm158, %v147, 0.0
        %vm167 = vcmask 130048
        %168 = vst.msk [vmem:[%s137] sm:$0xff] %vm167, %v159
        %169 = vst.msk [vmem:[%s137 + $0x8] sm:$0xff] %vm167, %v160
        %170 = vst.msk [vmem:[%s137 + $0x10] sm:$0xff] %vm167, %v161
        %171 = vst.msk [vmem:[%s137 + $0x18] sm:$0xff] %vm167, %v162
        %172 = vst.msk [vmem:[%s137 + $0x20] sm:$0xff] %vm167, %v163
        %173 = vst.msk [vmem:[%s137 + $0x28] sm:$0xff] %vm167, %v164
        %174 = vst.msk [vmem:[%s137 + $0x30] sm:$0xff] %vm167, %v165
        %175 = vst.msk [vmem:[%s137 + $0x38] sm:$0xff] %vm167, %v166
        %v177 = vsel %vm167, %v140, 0
        %v180 = vsel %vm167, %v141, 0
        %182 = vmatpush.msra.mxu0 0.0
        %183 = vmatpush.msra.mxu0 0.0
        %184 = vmatpush.msra.mxu0 0.0
        %185 = vmatpush.msra.mxu0 0.0
        %186 = vmatpush.msra.mxu0 0.0
        %187 = vmatpush.msra.mxu0 0.0
        %188 = vmatpush.msra.mxu0 0.0
        %189 = vmatpush.msra.mxu0 0.0
        %190 = vmatpush.msra.mxu0 0.0
        %191 = vmatpush.msra.mxu0 0.0
        %192 = vmatpush.msra.mxu0 0.0
        %193 = vmatpush.msra.mxu0 0.0
        %194 = vmatpush.msra.mxu0 0.0
        %195 = vmatpush.msra.mxu0 0.0
        %196 = vmatpush.msra.mxu0 %v141
        %197 = vmatpush.msra.mxu0 %v140
        %198 = vmatmul.f32.gmra.mxu0 %v177
        %v199 = vpop.f32.mrf.mxu0
        %v200 = vadd.f32 0.0, %v199
        %201 = vmatmul.f32.gmra.mxu0 %v180
        %v202 = vpop.f32.mrf.mxu0
        %v203 = vadd.f32 0.0, %v202
        %204 = vdwg.mxu0
        %v206 = vsel %vm167, %v142, 0
        %v209 = vsel %vm167, %v143, 0
        %211 = vmatpush.msra.mxu0 0.0
        %212 = vmatpush.msra.mxu0 0.0
        %213 = vmatpush.msra.mxu0 0.0
        %214 = vmatpush.msra.mxu0 0.0
        %215 = vmatpush.msra.mxu0 0.0
        %216 = vmatpush.msra.mxu0 0.0
        %217 = vmatpush.msra.mxu0 0.0
        %218 = vmatpush.msra.mxu0 0.0
        %219 = vmatpush.msra.mxu0 0.0
        %220 = vmatpush.msra.mxu0 0.0
        %221 = vmatpush.msra.mxu0 0.0
        %222 = vmatpush.msra.mxu0 0.0
        %223 = vmatpush.msra.mxu0 0.0
        %224 = vmatpush.msra.mxu0 0.0
        %225 = vmatpush.msra.mxu0 %v143
        %226 = vmatpush.msra.mxu0 %v142
        %227 = vmatmul.f32.gmra.mxu0 %v206
        %v228 = vpop.f32.mrf.mxu0
        %v229 = vadd.f32 0.0, %v228
        %230 = vmatmul.f32.gmra.mxu0 %v209
        %v231 = vpop.f32.mrf.mxu0
        %v232 = vadd.f32 0.0, %v231
        %233 = vdwg.mxu0
        %v235 = vsel %vm167, %v144, 0
        %v238 = vsel %vm167, %v145, 0
        %240 = vmatpush.msra.mxu0 0.0
        %241 = vmatpush.msra.mxu0 0.0
        %242 = vmatpush.msra.mxu0 0.0
        %243 = vmatpush.msra.mxu0 0.0
        %244 = vmatpush.msra.mxu0 0.0
        %245 = vmatpush.msra.mxu0 0.0
        %246 = vmatpush.msra.mxu0 0.0
        %247 = vmatpush.msra.mxu0 0.0
        %248 = vmatpush.msra.mxu0 0.0
        %249 = vmatpush.msra.mxu0 0.0
        %250 = vmatpush.msra.mxu0 0.0
        %251 = vmatpush.msra.mxu0 0.0
        %252 = vmatpush.msra.mxu0 0.0
        %253 = vmatpush.msra.mxu0 0.0
        %254 = vmatpush.msra.mxu0 %v145
        %255 = vmatpush.msra.mxu0 %v144
        %256 = vmatmul.f32.gmra.mxu0 %v235
        %v257 = vpop.f32.mrf.mxu0
        %v258 = vadd.f32 0.0, %v257
        %259 = vmatmul.f32.gmra.mxu0 %v238
        %v260 = vpop.f32.mrf.mxu0
        %v261 = vadd.f32 0.0, %v260
        %262 = vdwg.mxu0
        %v264 = vsel %vm167, %v146, 0
        %v267 = vsel %vm167, %v147, 0
        %269 = vmatpush.msra.mxu0 0.0
        %270 = vmatpush.msra.mxu0 0.0
        %271 = vmatpush.msra.mxu0 0.0
        %272 = vmatpush.msra.mxu0 0.0
        %273 = vmatpush.msra.mxu0 0.0
        %274 = vmatpush.msra.mxu0 0.0
        %275 = vmatpush.msra.mxu0 0.0
        %276 = vmatpush.msra.mxu0 0.0
        %277 = vmatpush.msra.mxu0 0.0
        %278 = vmatpush.msra.mxu0 0.0
        %279 = vmatpush.msra.mxu0 0.0
        %280 = vmatpush.msra.mxu0 0.0
        %281 = vmatpush.msra.mxu0 0.0
        %282 = vmatpush.msra.mxu0 0.0
        %283 = vmatpush.msra.mxu0 %v147
        %284 = vmatpush.msra.mxu0 %v146
        %285 = vmatmul.f32.gmra.mxu0 %v264
        %v286 = vpop.f32.mrf.mxu0
        %v287 = vadd.f32 0.0, %v286
        %288 = vmatmul.f32.gmra.mxu0 %v267
        %v289 = vpop.f32.mrf.mxu0
        %v290 = vadd.f32 0.0, %v289
        %291 = vdwg.mxu0
        %v292 = vsel %vm157, %v200, 0.0
        %v293 = vsel %vm158, %v203, 0.0
        %v294 = vsel %vm157, %v229, 0.0
        %v295 = vsel %vm158, %v232, 0.0
        %v296 = vsel %vm157, %v258, 0.0
        %v297 = vsel %vm158, %v261, 0.0
        %v298 = vsel %vm157, %v287, 0.0
        %v299 = vsel %vm158, %v290, 0.0
        %s300 = scalar_lea.vmem %s137, 64 [#allocation5]
        %301 = vst.msk [vmem:[%s300] sm:$0xff] %vm167, %v292
        %302 = vst.msk [vmem:[%s300 + $0x8] sm:$0xff] %vm167, %v293
        %303 = vst.msk [vmem:[%s300 + $0x10] sm:$0xff] %vm167, %v294
        %304 = vst.msk [vmem:[%s300 + $0x18] sm:$0xff] %vm167, %v295
        %305 = vst.msk [vmem:[%s300 + $0x20] sm:$0xff] %vm167, %v296
        %306 = vst.msk [vmem:[%s300 + $0x28] sm:$0xff] %vm167, %v297
        %307 = vst.msk [vmem:[%s300 + $0x30] sm:$0xff] %vm167, %v298
        %308 = vst.msk [vmem:[%s300 + $0x38] sm:$0xff] %vm167, %v299
        %s309 = sand.u32 %s52, 1
        %s310 = scalar_lea.sflag [#allocation4], %s309
        %s311 = sand.u32 %s52, 1
        %s312 = smul.addr %s311, 128
        %s313 = scalar_lea.vmem [#allocation5], %s312
        // Predicated region
        $region29: #{tpu_custom_call.1} parent=23 // pred_check
          %p314 = pneg %p62
        $region30: #{tpu_custom_call.1} parent=23 // pred_check_branch
          %316 = sbr.rel (%p314) target = $region32
        $region31: #{tpu_custom_call.1} parent=23 // pred_region
          #allocation7 [shape = 'u32[6]{0}', space=smem, size = 0x18, scoped, tag = 'DMA stride descriptor']
          %s317 = smul.u32 4, %s18
          %319 = vsyncadd %s310, 0
          %s320 = smul.addr %s317, 2
          %s321 = smul.addr %s320, 8
          %s322 = scalar_lea.hbm %s1, %s321
          %s324 = sshll.u32 1, 14
          %s325 = sxor.u32 4294967295, %s324
          %s328 = sshll.u32 7, 18
          %s329 = sxor.u32 4294967295, %s328
          %s330 = sand.u32 0, %s329
          %s332 = sor.u32 %s330, 0
          %s333 = sshll.u32 %s313, 4
          %s334 = int_to_ptr.vmem [resolvable:$true] %s333
          %s335 = sshll.u32 %s322, 4
          %s336 = int_to_ptr.hbm [resolvable:$true] %s335
          %342 = sst [smem:[#allocation7]] 1024
          %s343 = scalar_lea.smem [#allocation7], 1
          %344 = sst [smem:[%s343]] 2048
          %s345 = scalar_lea.smem [#allocation7], 2
          %346 = sst [smem:[%s345]] 8
          %s347 = scalar_lea.smem [#allocation7], 3
          %348 = sst [smem:[%s347]] 128
          %s349 = scalar_lea.smem [#allocation7], 4
          %350 = sst [smem:[%s349]] 128
          %s351 = scalar_lea.smem [#allocation7], 5
          %352 = sst [smem:[%s351]] 8
          %354 = dma.general %s334, 2048, %s336, %s310, [#allocation6], [#allocation7], %s332, 0
        $region32: #{tpu_custom_call.1} parent=23 // pred_fallthru
          _
      $region24: #{tpu_custom_call.1} parent=5 // pred_fallthru
        _
      %p355 = scmp.le.s32.totalorder 2, %s13
      // Predicated region
      $region33: #{tpu_custom_call.1} parent=5 // pred_check
        %p356 = pneg %p355
      $region34: #{tpu_custom_call.1} parent=5 // pred_check_branch
        %358 = sbr.rel (%p356) target = $region36
      $region35: #{tpu_custom_call.1} parent=5 // pred_region
        %s359 = ssub.s32 %s13, 2
        // Predicated region
        $region37: #{tpu_custom_call.1} parent=35 // pred_check
          %p360 = pneg %p68
        $region38: #{tpu_custom_call.1} parent=35 // pred_check_branch
          %362 = sbr.rel (%p360) target = $region40
        $region39: #{tpu_custom_call.1} parent=35 // pred_region
          %s363 = sand.u32 %s53, 1
          %s364 = scalar_lea.sflag [#allocation4], %s363
          %s365 = sand.u32 %s53, 1
          %s366 = smul.addr %s365, 128
          %s367 = scalar_lea.vmem [#allocation5], %s366
          %369 = dma.done %s364, 2048
        $region40: #{tpu_custom_call.1} parent=35 // pred_fallthru
          _
      $region36: #{tpu_custom_call.1} parent=5 // pred_fallthru
        _
    $region6: #{tpu_custom_call.1} parent=1 // loop_footer
      %s17 = sadd.s32 1, %s13
    $region7: #{tpu_custom_call.1} parent=1 // loop_footer_branch
      %12 = sbr.rel target = $region3
    $region8: #{tpu_custom_call.1} parent=1 // loop_exit
      _
    %370 = vsyncpa [#allocation3], 1
    %s371 = scalar_lea.sflag [#allocation3], 1
    %372 = vsyncpa %s371, 1
    %373 = vsyncpa [#allocation4], 1
    %s374 = scalar_lea.sflag [#allocation4], 1
    %375 = vsyncpa %s374, 1

</llo_original>
